<compile_context>
chip_gen: v5e
topology: v5e:2x2
jax: 0.10.0
libtpu: 0.0.40
codegen_flags: <defaults>
</compile_context>

<pallas_src>
import jax
import jax.numpy as jnp
from jax.experimental import pallas as pl
from jax.experimental.pallas import tpu as pltpu

PACK = 32                # batch elements packed per 128-lane row (32 * 4 features = 128)
LANES_IN = PACK * 4      # 128
LANES_HID = PACK * 8     # 256
LANES_OUT = PACK * 2     # 64


def policy_net_kernel(x_ref, w1_ref, b1_ref, wd_ref, bd_ref, out_ref):
    # x: (TR, 128) -- 32 batch elements per row, 4 features each, interleaved along lanes.
    x = x_ref[...]
    # Layer 1 (+ lane de-interleave folded into the weights): MXU (TR,128)@(128,256).
    h = jnp.dot(x, w1_ref[...], preferred_element_type=jnp.float32) + b1_ref[...]
    h = jnp.maximum(h, 0.0)                                            # ReLU (VPU)
    # Layer 2 emits the paired logit difference directly:
    #   d[:, 2i+c] = logit_{1-c} - logit_c  for batch element i of the row.
    d = jnp.dot(h, wd_ref[...], preferred_element_type=jnp.float32) + bd_ref[...]
    # Exact 2-class softmax: p_c = 1 / (1 + exp(l_{1-c} - l_c)); exp on the EUP, rest on
    # the VPU.  Antisymmetric d per class pair => the two probabilities sum to 1 exactly
    # (ULP level).  Numerically stable (large |d| saturates to 0/1 via inf, no NaNs).
    out_ref[...] = 1.0 / (1.0 + jnp.exp(d))


def policy_net_forward(x, w1, b1, w2, b2, *, tb=131072):
    """x: (B, 4); params in torch layout w1 (8,4), b1 (8,), w2 (2,8), b2 (2,).

    Returns (B, 2) float32 softmax probabilities (== PolicyNet.forward)."""
    B = x.shape[0]

    # ---- grid sizing: rows of the lane-packed view (each row = PACK batch elements) ----
    r_min = max(8, pl.cdiv(pl.cdiv(B, PACK), 8) * 8)       # sublane-aligned row count
    tr_max = max(8, (tb // PACK) // 8 * 8)                 # row tile from the batch tile
    steps = max(1, pl.cdiv(r_min, tr_max))
    if r_min > 8:
        steps = max(steps, 2)      # >=2 grid steps so "parallel" can use both v7x cores
    tr = max(8, pl.cdiv(pl.cdiv(r_min, steps), 8) * 8)     # rows per grid step
    rows = steps * tr
    bp = rows * PACK                                       # padded batch

    # ---- layout: contiguous views only (no transpose passes over HBM) ----
    xf = x.astype(jnp.float32)
    x_pad = jnp.pad(xf, ((0, bp - B), (0, 0)))             # (bp, 4)
    x_view = x_pad.reshape(rows, LANES_IN)                 # (rows, 128), row-major view

    # ---- fold the lane de-interleave into small VMEM-resident weights ----
    eye = jnp.eye(PACK, dtype=jnp.float32)
    w1f = w1.astype(jnp.float32)
    b1f = b1.astype(jnp.float32)
    w2f = w2.astype(jnp.float32)
    b2f = b2.astype(jnp.float32)
    w1_big = jnp.kron(eye, w1f.T)                          # (128, 256)
    b1_big = jnp.tile(b1f, PACK).reshape(1, LANES_HID)     # (1, 256)
    w2d = w2f[::-1] - w2f                                  # (2, 8): row c = w2[1-c] - w2[c]
    b2d = b2f[::-1] - b2f                                  # (2,)
    wd_big = jnp.kron(eye, w2d.T)                          # (256, 64)
    bd_big = jnp.tile(b2d, PACK).reshape(1, LANES_OUT)     # (1, 64)

    param_bytes = 4 * (w1_big.size + b1_big.size + wd_big.size + bd_big.size)
    cost = pl.CostEstimate(
        flops=2 * rows * (LANES_IN * LANES_HID + LANES_HID * LANES_OUT),
        transcendentals=rows * LANES_OUT,                  # one exp per output element
        bytes_accessed=bp * 4 * 4 + bp * 2 * 4 + param_bytes,
    )

    out_view = pl.pallas_call(
        policy_net_kernel,
        out_shape=jax.ShapeDtypeStruct((rows, LANES_OUT), jnp.float32),
        grid=(steps,),
        in_specs=[
            pl.BlockSpec((tr, LANES_IN), lambda i: (i, 0)),          # x: tiled over rows
            pl.BlockSpec((LANES_IN, LANES_HID), lambda i: (0, 0)),   # W1_big: resident
            pl.BlockSpec((1, LANES_HID), lambda i: (0, 0)),          # b1: resident
            pl.BlockSpec((LANES_HID, LANES_OUT), lambda i: (0, 0)),  # Wd_big: resident
            pl.BlockSpec((1, LANES_OUT), lambda i: (0, 0)),          # bd: resident
        ],
        out_specs=pl.BlockSpec((tr, LANES_OUT), lambda i: (i, 0)),
        compiler_params=pltpu.CompilerParams(
            dimension_semantics=("parallel",),     # batch-row axis: megacore-shardable
            vmem_limit_bytes=32 * 1024 * 1024,     # headroom for the double-buffered tiles
        ),
        cost_estimate=cost,
    )(x_view, w1_big, b1_big, wd_big, bd_big)

    # (rows, 64) is a contiguous view of (bp, 2): reshape and drop the padded rows.
    return out_view.reshape(bp, 2)[:B]


def init_params(key):
    """Deterministic init mimicking torch.nn.Linear default (U(-1/sqrt(fan_in), +)),
    stored in torch layout: weight (out_features, in_features), bias (out_features,)."""
    k1, k2, k3, k4 = jax.random.split(key, 4)
    bound1 = 1.0 / jnp.sqrt(4.0)
    bound2 = 1.0 / jnp.sqrt(8.0)
    w1 = jax.random.uniform(k1, (8, 4), jnp.float32, -bound1, bound1)
    b1 = jax.random.uniform(k2, (8,), jnp.float32, -bound1, bound1)
    w2 = jax.random.uniform(k3, (2, 8), jnp.float32, -bound2, bound2)
    b2 = jax.random.uniform(k4, (2,), jnp.float32, -bound2, bound2)
    return w1, b1, w2, b2


def reference_forward(x, w1, b1, w2, b2):
    hp = jax.lax.Precision.HIGHEST
    h = jnp.maximum(jnp.dot(x, w1.T, precision=hp) + b1, 0.0)
    logits = jnp.dot(h, w2.T, precision=hp) + b2
    return jax.nn.softmax(logits, axis=-1)


if __name__ == "__main__":
    key = jax.random.PRNGKey(0)
    kx, kp = jax.random.split(key)
    batch = 8
    x = jax.random.normal(kx, (batch, 4), jnp.float32)
    w1, b1, w2, b2 = init_params(kp)

    out = policy_net_forward(x, w1, b1, w2, b2)
    out = jax.block_until_ready(out)

    ref = reference_forward(x, w1, b1, w2, b2)
    assert out.shape == (batch, 2)
    assert jnp.allclose(out, ref, atol=2e-3, rtol=2e-3), "mismatch vs reference"
    assert jnp.allclose(jnp.sum(out, axis=-1), 1.0, atol=1e-4), "softmax rows must sum to 1"

    print("KERNEL_OK")
</pallas_src>

<mosaic_0001>
module attributes {stable_mosaic.version = 11 : i64} {
  func.func @policy_net_kernel(%arg0: i32, %arg1: memref<8x128xf32, #tpu.memory_space<vmem>>, %arg2: memref<128x256xf32, #tpu.memory_space<vmem>>, %arg3: memref<1x256xf32, #tpu.memory_space<vmem>>, %arg4: memref<256x64xf32, #tpu.memory_space<vmem>>, %arg5: memref<1x64xf32, #tpu.memory_space<vmem>>, %arg6: memref<8x64xf32, #tpu.memory_space<vmem>>) attributes {dimension_semantics = [#tpu.dimension_semantics<parallel>], iteration_bounds = array<i64: 1>, scalar_prefetch = 0 : i64, scratch_operands = 0 : i64, tpu.core_type = #tpu.core_type<tc>, window_params = [{transform_indices = @transform_0, window_bounds = array<i64: 8, 128>}, {pipeline_mode = #tpu.pipeline_mode<synchronous>, transform_indices = @transform_1, window_bounds = array<i64: 128, 256>}, {pipeline_mode = #tpu.pipeline_mode<synchronous>, transform_indices = @transform_2, window_bounds = array<i64: 1, 256>}, {pipeline_mode = #tpu.pipeline_mode<synchronous>, transform_indices = @transform_3, window_bounds = array<i64: 256, 64>}, {pipeline_mode = #tpu.pipeline_mode<synchronous>, transform_indices = @transform_4, window_bounds = array<i64: 1, 64>}, {transform_indices = @transform_5, window_bounds = array<i64: 8, 64>}]} {
    %c0 = arith.constant 0 : index
    %c0_0 = arith.constant 0 : index
    %0 = vector.load %arg1[%c0, %c0_0] : memref<8x128xf32, #tpu.memory_space<vmem>>, vector<8x128xf32>
    %c0_1 = arith.constant 0 : index
    %c0_2 = arith.constant 0 : index
    %1 = vector.load %arg2[%c0_1, %c0_2] : memref<128x256xf32, #tpu.memory_space<vmem>>, vector<128x256xf32>
    %cst = arith.constant dense<0.000000e+00> : vector<8x256xf32>
    %2 = tpu.matmul %0, %1, %cst {dimension_numbers = #tpu.dot_dimension_numbers<[1], [0], [0], [1], [0, 0, 1, 1], [], []>} : vector<8x128xf32>, vector<128x256xf32>, vector<8x256xf32> -> vector<8x256xf32>
    %c0_3 = arith.constant 0 : index
    %c0_4 = arith.constant 0 : index
    %3 = vector.load %arg3[%c0_3, %c0_4] : memref<1x256xf32, #tpu.memory_space<vmem>>, vector<1x256xf32>
    %4 = vector.broadcast %3 : vector<1x256xf32> to vector<8x256xf32>
    %5 = arith.addf %2, %4 : vector<8x256xf32>
    %cst_5 = arith.constant 0.000000e+00 : f32
    %6 = vector.broadcast %cst_5 : f32 to vector<8x256xf32>
    %7 = arith.maximumf %5, %6 : vector<8x256xf32>
    %c0_6 = arith.constant 0 : index
    %c0_7 = arith.constant 0 : index
    %8 = vector.load %arg4[%c0_6, %c0_7] : memref<256x64xf32, #tpu.memory_space<vmem>>, vector<256x64xf32>
    %cst_8 = arith.constant dense<0.000000e+00> : vector<8x64xf32>
    %9 = tpu.matmul %7, %8, %cst_8 {dimension_numbers = #tpu.dot_dimension_numbers<[1], [0], [0], [1], [0, 0, 1, 1], [], []>} : vector<8x256xf32>, vector<256x64xf32>, vector<8x64xf32> -> vector<8x64xf32>
    %c0_9 = arith.constant 0 : index
    %c0_10 = arith.constant 0 : index
    %10 = vector.load %arg5[%c0_9, %c0_10] : memref<1x64xf32, #tpu.memory_space<vmem>>, vector<1x64xf32>
    %11 = vector.broadcast %10 : vector<1x64xf32> to vector<8x64xf32>
    %12 = arith.addf %9, %11 : vector<8x64xf32>
    %13 = math.exp %12 : vector<8x64xf32>
    %cst_11 = arith.constant 1.000000e+00 : f32
    %14 = vector.broadcast %cst_11 : f32 to vector<8x64xf32>
    %15 = arith.addf %14, %13 : vector<8x64xf32>
    %cst_12 = arith.constant 1.000000e+00 : f32
    %16 = vector.broadcast %cst_12 : f32 to vector<8x64xf32>
    %17 = arith.divf %16, %15 : vector<8x64xf32>
    %c0_13 = arith.constant 0 : index
    %c0_14 = arith.constant 0 : index
    %18 = vector.load %arg6[%c0_13, %c0_14] : memref<8x64xf32, #tpu.memory_space<vmem>>, vector<8x64xf32>
    tpu.vector_store %arg6[%c0_13, %c0_14], %17 {strides = array<i32>} : memref<8x64xf32, #tpu.memory_space<vmem>>, vector<8x64xf32>,
    return
  }
  func.func @transform_0(%arg0: i32) -> (i32, i32) {
    %c0_i32 = arith.constant 0 : i32
    %c0_i32_0 = arith.constant 0 : i32
    return %arg0, %c0_i32 : i32, i32
  }
  func.func @transform_1(%arg0: i32) -> (i32, i32) {
    %c0_i32 = arith.constant 0 : i32
    %c0_i32_0 = arith.constant 0 : i32
    %c0_i32_1 = arith.constant 0 : i32
    return %c0_i32, %c0_i32_0 : i32, i32
  }
  func.func @transform_2(%arg0: i32) -> (i32, i32) {
    %c0_i32 = arith.constant 0 : i32
    %c0_i32_0 = arith.constant 0 : i32
    %c0_i32_1 = arith.constant 0 : i32
    return %c0_i32, %c0_i32_0 : i32, i32
  }
  func.func @transform_3(%arg0: i32) -> (i32, i32) {
    %c0_i32 = arith.constant 0 : i32
    %c0_i32_0 = arith.constant 0 : i32
    %c0_i32_1 = arith.constant 0 : i32
    return %c0_i32, %c0_i32_0 : i32, i32
  }
  func.func @transform_4(%arg0: i32) -> (i32, i32) {
    %c0_i32 = arith.constant 0 : i32
    %c0_i32_0 = arith.constant 0 : i32
    %c0_i32_1 = arith.constant 0 : i32
    return %c0_i32, %c0_i32_0 : i32, i32
  }
  func.func @transform_5(%arg0: i32) -> (i32, i32) {
    %c0_i32 = arith.constant 0 : i32
    %c0_i32_0 = arith.constant 0 : i32
    return %arg0, %c0_i32 : i32, i32
  }
}

</mosaic_0001>

<llo_original>
// kernel: tpu_custom_call.1
$region0: #{tpu_custom_call.1}
  #allocation0 [shape = 'u32[]', space=smem, size = 0x4, offset = 0x4, fixed_abs, tag = 'smem constant byte address 0x4 - core index']
  #allocation1 [shape = 'u32[72,128]{1,0:T(1,128)}', space=vmem, size = 0x9000, scoped, tag = 'internal scratch']
  %s0 = inlined_call_operand.vmem [shape: f32[8,128], index: 0, kind: input, shape index: {}]
  %s1 = inlined_call_operand.vmem [shape: f32[128,256], index: 1, kind: input, shape index: {}]
  %s2 = inlined_call_operand.vmem [shape: f32[1,256], index: 2, kind: input, shape index: {}]
  %s3 = inlined_call_operand.vmem [shape: f32[256,64], index: 3, kind: input, shape index: {}]
  %s4 = inlined_call_operand.vmem [shape: f32[1,64], index: 4, kind: input, shape index: {}]
  %s5 = inlined_call_operand.hbm [shape: f32[8,64], index: 5, kind: output, shape index: {}]
  %s6 = sld [smem:[#allocation0]]
  $region30: #{tpu_custom_call.1} parent=0
    _
  %s8 = ssub.s32 1, %s6
  %s9 = scalar_select 0, %s8, %s6
  $region1: #{tpu_custom_call.1} parent=0
    #allocation2 [shape = 'u8[4096]{0}', space=vmem, size = 0x1000, scoped, tag = 'output window, operand 0, single buffered']
    #allocation3 [shape = 's32[1]{0}', space=sflag, size = 0x4, scoped, tag = 'scoped memory for tpu_custom_call.1']
    %10 = vsyncpa [#allocation3], 0
    // Predicated region
    $region2: #{tpu_custom_call.1} parent=1 // pred_check
      _
    $region3: #{tpu_custom_call.1} parent=1 // pred_check_branch
      %12 = sbr.rel (0) target = $region5
    $region4: #{tpu_custom_call.1} parent=1 // pred_region
      _
    $region5: #{tpu_custom_call.1} parent=1 // pred_fallthru
      _
    // Predicated region
    $region6: #{tpu_custom_call.1} parent=1 // pred_check
      _
    $region7: #{tpu_custom_call.1} parent=1 // pred_check_branch
      %14 = sbr.rel (0) target = $region9
    $region8: #{tpu_custom_call.1} parent=1 // pred_region
      _
    $region9: #{tpu_custom_call.1} parent=1 // pred_fallthru
      _
    // Predicated region
    $region10: #{tpu_custom_call.1} parent=1 // pred_check
      _
    $region11: #{tpu_custom_call.1} parent=1 // pred_check_branch
      %16 = sbr.rel (0) target = $region13
    $region12: #{tpu_custom_call.1} parent=1 // pred_region
      _
    $region13: #{tpu_custom_call.1} parent=1 // pred_fallthru
      _
    // Predicated region
    $region14: #{tpu_custom_call.1} parent=1 // pred_check
      _
    $region15: #{tpu_custom_call.1} parent=1 // pred_check_branch
      %18 = sbr.rel (0) target = $region17
    $region16: #{tpu_custom_call.1} parent=1 // pred_region
      _
    $region17: #{tpu_custom_call.1} parent=1 // pred_fallthru
      _
    // Predicated region
    $region18: #{tpu_custom_call.1} parent=1 // pred_check
      _
    $region19: #{tpu_custom_call.1} parent=1 // pred_check_branch
      %20 = sbr.rel (0) target = $region21
    $region20: #{tpu_custom_call.1} parent=1 // pred_region
      _
    $region21: #{tpu_custom_call.1} parent=1 // pred_fallthru
      _
    %v21 = vld [vmem:[%s0] sm:$0xff]
    %v22 = vld [vmem:[%s1] sm:$0xff]
    %v23 = vld [vmem:[%s1 + $0x8] sm:$0xff]
    %v24 = vld [vmem:[%s1 + $0x10] sm:$0xff]
    %v25 = vld [vmem:[%s1 + $0x18] sm:$0xff]
    %v26 = vld [vmem:[%s1 + $0x20] sm:$0xff]
    %v27 = vld [vmem:[%s1 + $0x28] sm:$0xff]
    %v28 = vld [vmem:[%s1 + $0x30] sm:$0xff]
    %v29 = vld [vmem:[%s1 + $0x38] sm:$0xff]
    %v30 = vld [vmem:[%s1 + $0x40] sm:$0xff]
    %v31 = vld [vmem:[%s1 + $0x48] sm:$0xff]
    %v32 = vld [vmem:[%s1 + $0x50] sm:$0xff]
    %v33 = vld [vmem:[%s1 + $0x58] sm:$0xff]
    %v34 = vld [vmem:[%s1 + $0x60] sm:$0xff]
    %v35 = vld [vmem:[%s1 + $0x68] sm:$0xff]
    %v36 = vld [vmem:[%s1 + $0x70] sm:$0xff]
    %v37 = vld [vmem:[%s1 + $0x78] sm:$0xff]
    %v38 = vld [vmem:[%s1 + $0x80] sm:$0xff]
    %v39 = vld [vmem:[%s1 + $0x88] sm:$0xff]
    %v40 = vld [vmem:[%s1 + $0x90] sm:$0xff]
    %v41 = vld [vmem:[%s1 + $0x98] sm:$0xff]
    %v42 = vld [vmem:[%s1 + $0xa0] sm:$0xff]
    %v43 = vld [vmem:[%s1 + $0xa8] sm:$0xff]
    %v44 = vld [vmem:[%s1 + $0xb0] sm:$0xff]
    %v45 = vld [vmem:[%s1 + $0xb8] sm:$0xff]
    %v46 = vld [vmem:[%s1 + $0xc0] sm:$0xff]
    %v47 = vld [vmem:[%s1 + $0xc8] sm:$0xff]
    %v48 = vld [vmem:[%s1 + $0xd0] sm:$0xff]
    %v49 = vld [vmem:[%s1 + $0xd8] sm:$0xff]
    %v50 = vld [vmem:[%s1 + $0xe0] sm:$0xff]
    %v51 = vld [vmem:[%s1 + $0xe8] sm:$0xff]
    %v52 = vld [vmem:[%s1 + $0xf0] sm:$0xff]
    %v53 = vld [vmem:[%s1 + $0xf8] sm:$0xff]
    %v54 = vld [vmem:[%s2] sm:$0x3]
    %v56 = vperm.slane %v54, 0
    %v57 = vperm.slane %v54, 1
    %60 = vmatpush.msra.mxu0 %v52
    %61 = vmatpush.msra.mxu0 %v50
    %62 = vmatpush.msra.mxu0 %v48
    %63 = vmatpush.msra.mxu0 %v46
    %64 = vmatpush.msra.mxu0 %v44
    %65 = vmatpush.msra.mxu0 %v42
    %66 = vmatpush.msra.mxu0 %v40
    %67 = vmatpush.msra.mxu0 %v38
    %68 = vmatpush.msra.mxu0 %v36
    %69 = vmatpush.msra.mxu0 %v34
    %70 = vmatpush.msra.mxu0 %v32
    %71 = vmatpush.msra.mxu0 %v30
    %72 = vmatpush.msra.mxu0 %v28
    %73 = vmatpush.msra.mxu0 %v26
    %74 = vmatpush.msra.mxu0 %v24
    %75 = vmatpush.msra.mxu0 %v22
    %76 = vmatmul.f32.gmra.mxu0 %v21
    %v77 = vpop.f32.mrf.mxu0
    %v78 = vadd.f32 %v56, %v77
    %79 = vdwg.mxu0
    %80 = vmatpush.msra.mxu0 %v53
    %81 = vmatpush.msra.mxu0 %v51
    %82 = vmatpush.msra.mxu0 %v49
    %83 = vmatpush.msra.mxu0 %v47
    %84 = vmatpush.msra.mxu0 %v45
    %85 = vmatpush.msra.mxu0 %v43
    %86 = vmatpush.msra.mxu0 %v41
    %87 = vmatpush.msra.mxu0 %v39
    %88 = vmatpush.msra.mxu0 %v37
    %89 = vmatpush.msra.mxu0 %v35
    %90 = vmatpush.msra.mxu0 %v33
    %91 = vmatpush.msra.mxu0 %v31
    %92 = vmatpush.msra.mxu0 %v29
    %93 = vmatpush.msra.mxu0 %v27
    %94 = vmatpush.msra.mxu0 %v25
    %95 = vmatpush.msra.mxu0 %v23
    %96 = vmatmul.f32.gmra.mxu0 %v21
    %v97 = vpop.f32.mrf.mxu0
    %v98 = vadd.f32 %v57, %v97
    %99 = vdwg.mxu0
    %v100 = vmax.f32 %v78, 0.0
    %v101 = vmax.f32 %v98, 0.0
    %v102 = vld [vmem:[%s3] sm:$0xff]
    %v103 = vld [vmem:[%s3 + $0x8] sm:$0xff]
    %v104 = vld [vmem:[%s3 + $0x10] sm:$0xff]
    %v105 = vld [vmem:[%s3 + $0x18] sm:$0xff]
    %v106 = vld [vmem:[%s3 + $0x20] sm:$0xff]
    %v107 = vld [vmem:[%s3 + $0x28] sm:$0xff]
    %v108 = vld [vmem:[%s3 + $0x30] sm:$0xff]
    %v109 = vld [vmem:[%s3 + $0x38] sm:$0xff]
    %v110 = vld [vmem:[%s3 + $0x40] sm:$0xff]
    %v111 = vld [vmem:[%s3 + $0x48] sm:$0xff]
    %v112 = vld [vmem:[%s3 + $0x50] sm:$0xff]
    %v113 = vld [vmem:[%s3 + $0x58] sm:$0xff]
    %v114 = vld [vmem:[%s3 + $0x60] sm:$0xff]
    %v115 = vld [vmem:[%s3 + $0x68] sm:$0xff]
    %v116 = vld [vmem:[%s3 + $0x70] sm:$0xff]
    %v117 = vld [vmem:[%s3 + $0x78] sm:$0xff]
    %v118 = vld [vmem:[%s3 + $0x80] sm:$0xff]
    %v119 = vld [vmem:[%s3 + $0x88] sm:$0xff]
    %v120 = vld [vmem:[%s3 + $0x90] sm:$0xff]
    %v121 = vld [vmem:[%s3 + $0x98] sm:$0xff]
    %v122 = vld [vmem:[%s3 + $0xa0] sm:$0xff]
    %v123 = vld [vmem:[%s3 + $0xa8] sm:$0xff]
    %v124 = vld [vmem:[%s3 + $0xb0] sm:$0xff]
    %v125 = vld [vmem:[%s3 + $0xb8] sm:$0xff]
    %v126 = vld [vmem:[%s3 + $0xc0] sm:$0xff]
    %v127 = vld [vmem:[%s3 + $0xc8] sm:$0xff]
    %v128 = vld [vmem:[%s3 + $0xd0] sm:$0xff]
    %v129 = vld [vmem:[%s3 + $0xd8] sm:$0xff]
    %v130 = vld [vmem:[%s3 + $0xe0] sm:$0xff]
    %v131 = vld [vmem:[%s3 + $0xe8] sm:$0xff]
    %v132 = vld [vmem:[%s3 + $0xf0] sm:$0xff]
    %v133 = vld [vmem:[%s3 + $0xf8] sm:$0xff]
    %v134 = vld [vmem:[%s4] sm:$0x1]
    %v136 = vperm.slane %v134, 0
    %138 = vmatpush.msra.mxu0 %v117
    %139 = vmatpush.msra.mxu0 %v116
    %140 = vmatpush.msra.mxu0 %v115
    %141 = vmatpush.msra.mxu0 %v114
    %142 = vmatpush.msra.mxu0 %v113
    %143 = vmatpush.msra.mxu0 %v112
    %144 = vmatpush.msra.mxu0 %v111
    %145 = vmatpush.msra.mxu0 %v110
    %146 = vmatpush.msra.mxu0 %v109
    %147 = vmatpush.msra.mxu0 %v108
    %148 = vmatpush.msra.mxu0 %v107
    %149 = vmatpush.msra.mxu0 %v106
    %150 = vmatpush.msra.mxu0 %v105
    %151 = vmatpush.msra.mxu0 %v104
    %152 = vmatpush.msra.mxu0 %v103
    %153 = vmatpush.msra.mxu0 %v102
    %154 = vmatmul.f32.gmra.mxu0 %v100
    %v155 = vpop.f32.mrf.mxu0
    %v156 = vadd.f32 %v136, %v155
    %157 = vdwg.mxu0
    %158 = vmatpush.msra.mxu0 %v133
    %159 = vmatpush.msra.mxu0 %v132
    %160 = vmatpush.msra.mxu0 %v131
    %161 = vmatpush.msra.mxu0 %v130
    %162 = vmatpush.msra.mxu0 %v129
    %163 = vmatpush.msra.mxu0 %v128
    %164 = vmatpush.msra.mxu0 %v127
    %165 = vmatpush.msra.mxu0 %v126
    %166 = vmatpush.msra.mxu0 %v125
    %167 = vmatpush.msra.mxu0 %v124
    %168 = vmatpush.msra.mxu0 %v123
    %169 = vmatpush.msra.mxu0 %v122
    %170 = vmatpush.msra.mxu0 %v121
    %171 = vmatpush.msra.mxu0 %v120
    %172 = vmatpush.msra.mxu0 %v119
    %173 = vmatpush.msra.mxu0 %v118
    %174 = vmatmul.f32.gmra.mxu0 %v101
    %v175 = vpop.f32.mrf.mxu0
    %v176 = vadd.f32 %v156, %v175
    %177 = vdwg.mxu0
    %v178 = vmul.f32 %v176, 1.442695
    %v179 = vpow.pop %v178
    %v180 = vadd.f32 %v179, 1.0
    %v181 = vrcp.pop %v180
    %v182 = vmul.f32 %v180, %v181
    %v183 = vsub.f32 1.0, %v182
    %v184 = vmul.f32 %v181, %v183
    %v185 = vadd.f32 %v181, %v184
    %vm186 = vweird.f32 %v180
    %vm187 = vweird.f32 %v181
    %vm188 = vmor %vm186, %vm187
    %v189 = vsel %vm188, %v181, %v185
    %v190 = vand.u32 2147483647, %v180
    %vm191 = vcmp.eq.f32.partialorder %v190, 8.507059e+37
    %v192 = vand.u32 %v180, 2147483648
    %v193 = vor.u32 1.1754944e-38, %v192
    %v194 = vsel %vm191, %v193, %v189
    %v195 = vmul.f32 1.0, %v194
    %vm196 = vcmask 523264
    %197 = vst.msk [vmem:[#allocation2] sm:$0xff] %vm196, %v195
    // Predicated region
    $region22: #{tpu_custom_call.1} parent=1 // pred_check
      _
    $region23: #{tpu_custom_call.1} parent=1 // pred_check_branch
      %199 = sbr.rel (0) target = $region25
    $region24: #{tpu_custom_call.1} parent=1 // pred_region
      %201 = vsyncadd [#allocation3], 0
      %s203 = sshll.u32 [#allocation2], 4
      %s204 = int_to_ptr.vmem [resolvable:$true] %s203
      %s205 = sshll.u32 %s5, 4
      %s206 = int_to_ptr.hbm [resolvable:$true] %s205
      %208 = dma.vmem_to_hbm [thread:$0]  %s204, 128, %s206, [#allocation3]
    $region25: #{tpu_custom_call.1} parent=1 // pred_fallthru
      _
    // Predicated region
    $region26: #{tpu_custom_call.1} parent=1 // pred_check
      _
    $region27: #{tpu_custom_call.1} parent=1 // pred_check_branch
      %210 = sbr.rel (0) target = $region29
    $region28: #{tpu_custom_call.1} parent=1 // pred_region
      %212 = dma.done [#allocation3], 128
    $region29: #{tpu_custom_call.1} parent=1 // pred_fallthru
      _
    %213 = vsyncpa [#allocation3], 1

</llo_original>
